<compile_context>
chip_gen: v7x
topology: tpu7x:2x2x1
jax: 0.10.0
libtpu: 0.0.40
codegen_flags: <defaults>
</compile_context>

<pallas_src>
import functools
import math

import jax
import jax.numpy as jnp
from jax import lax
from jax.experimental import pallas as pl
from jax.experimental.pallas import tpu as pltpu

LABEL_PAD = 128                      # classifier output padded to a full lane tile
VMEM_LIMIT = 48 * 1024 * 1024        # explicit scoped-VMEM budget (fits v7x 64 MiB)


def _row_tile(n, target):
    """Largest row-tile <= target that divides n (multiple of 8 when tiling)."""
    if n <= target:
        return n
    t = (target // 8) * 8
    while t >= 8:
        if n % t == 0:
            return t
        t -= 8
    return n


def _cparams():
    return pltpu.CompilerParams(dimension_semantics=("parallel",),
                                vmem_limit_bytes=VMEM_LIMIT)


# ----------------------------- Pallas kernels ------------------------------


def _embed_ln_kernel(w_ref, p_ref, t_ref, g_ref, b_ref, o_ref, *, eps):
    """word + position + token-type embedding sum fused with LayerNorm."""
    x = w_ref[...] + p_ref[...] + t_ref[...]                     # f32 [S, H]
    mu = jnp.mean(x, axis=-1, keepdims=True)
    xc = x - mu
    var = jnp.mean(xc * xc, axis=-1, keepdims=True)
    y = xc * lax.rsqrt(var + eps) * g_ref[...] + b_ref[...]
    o_ref[...] = y.astype(o_ref.dtype)


def embed_layernorm(word_rows, pos_emb, tok0, gamma, beta, B, S, eps=1e-12):
    N, H = word_rows.shape
    kern = functools.partial(_embed_ln_kernel, eps=eps)
    return pl.pallas_call(
        kern,
        out_shape=jax.ShapeDtypeStruct((N, H), jnp.bfloat16),
        grid=(B,),
        in_specs=[
            pl.BlockSpec((S, H), lambda i: (i, 0)),
            pl.BlockSpec((S, H), lambda i: (0, 0)),
            pl.BlockSpec((1, H), lambda i: (0, 0)),
            pl.BlockSpec((1, H), lambda i: (0, 0)),
            pl.BlockSpec((1, H), lambda i: (0, 0)),
        ],
        out_specs=pl.BlockSpec((S, H), lambda i: (i, 0)),
        compiler_params=_cparams(),
    )(word_rows, pos_emb, tok0, gamma, beta)


def _qkv_kernel(x_ref, w_ref, b_ref, o_ref):
    """Fused QKV projection; LoRA already merged into W at pack time."""
    y = jnp.dot(x_ref[...], w_ref[...], preferred_element_type=jnp.float32) + b_ref[...]
    o_ref[...] = y.astype(o_ref.dtype)


def qkv_proj(x, w_cat, b_qkv):
    N, H = x.shape
    M = w_cat.shape[1]
    TN = _row_tile(N, 256)
    return pl.pallas_call(
        _qkv_kernel,
        out_shape=jax.ShapeDtypeStruct((N, M), jnp.bfloat16),
        grid=(N // TN,),
        in_specs=[
            pl.BlockSpec((TN, H), lambda i: (i, 0)),
            pl.BlockSpec((H, M), lambda i: (0, 0)),       # weight stays VMEM-resident
            pl.BlockSpec((1, M), lambda i: (0, 0)),
        ],
        out_specs=pl.BlockSpec((TN, M), lambda i: (i, 0)),
        compiler_params=_cparams(),
    )(x, w_cat, b_qkv)


def _attn_kernel(qkv_ref, m_ref, o_ref, *, H, nh, dh, scale):
    """One batch per grid step; per-head scoring (only one [S,S] live at a time);
    lane-dense [S, H] output (heads packed back into the lane dim in-VMEM)."""
    m = m_ref[0]                                                 # [1, S] f32 key mask
    for h in range(nh):                                          # static, unrolled
        q = qkv_ref[0, :, h * dh:(h + 1) * dh]                   # [S, dh] bf16
        k = qkv_ref[0, :, H + h * dh:H + (h + 1) * dh]
        v = qkv_ref[0, :, 2 * H + h * dh:2 * H + (h + 1) * dh]
        # q @ k^T via dot_general contracting the shared dh axis (MXU handles the
        # transposed RHS; avoids an HBM-side K transpose).
        s = lax.dot_general(q, k, (((1,), (1,)), ((), ())),
                            preferred_element_type=jnp.float32)  # [S, S] f32
        s = s * scale + m
        s = s - jnp.max(s, axis=-1, keepdims=True)
        p = jnp.exp(s)
        p = p * pl.reciprocal(jnp.sum(p, axis=-1, keepdims=True), approx=True)
        ctx = jnp.dot(p.astype(jnp.bfloat16), v,
                      preferred_element_type=jnp.float32)        # [S, dh]
        o_ref[0, :, h * dh:(h + 1) * dh] = ctx.astype(o_ref.dtype)


def attention(qkv, mask_bias, H, nh, dh, scale):
    """qkv: [B, S, 3H] bf16; mask_bias: [B, 1, S] f32 -> [B, S, H] bf16."""
    B, S, M = qkv.shape
    kern = functools.partial(_attn_kernel, H=H, nh=nh, dh=dh, scale=scale)
    return pl.pallas_call(
        kern,
        out_shape=jax.ShapeDtypeStruct((B, S, H), jnp.bfloat16),
        grid=(B,),
        in_specs=[
            pl.BlockSpec((1, S, M), lambda b: (b, 0, 0)),
            pl.BlockSpec((1, 1, S), lambda b: (b, 0, 0)),
        ],
        out_specs=pl.BlockSpec((1, S, H), lambda b: (b, 0, 0)),
        compiler_params=_cparams(),
    )(qkv, mask_bias)


def _attn_out_ln_kernel(ctx_ref, res_ref, w_ref, b_ref, g_ref, beta_ref, o_ref, *, eps):
    y = jnp.dot(ctx_ref[...], w_ref[...], preferred_element_type=jnp.float32)
    y = y + b_ref[...] + res_ref[...].astype(jnp.float32)        # bias + residual (f32)
    mu = jnp.mean(y, axis=-1, keepdims=True)
    yc = y - mu
    var = jnp.mean(yc * yc, axis=-1, keepdims=True)
    o_ref[...] = (yc * lax.rsqrt(var + eps) * g_ref[...] + beta_ref[...]).astype(o_ref.dtype)


def attn_out_residual_ln(ctx, resid, wo, bo, g, b, eps=1e-12):
    N, H = ctx.shape
    TN = _row_tile(N, 512)      # mem-bound kernel: only an [H,H] weight is resident
    kern = functools.partial(_attn_out_ln_kernel, eps=eps)
    return pl.pallas_call(
        kern,
        out_shape=jax.ShapeDtypeStruct((N, H), jnp.bfloat16),
        grid=(N // TN,),
        in_specs=[
            pl.BlockSpec((TN, H), lambda i: (i, 0)),
            pl.BlockSpec((TN, H), lambda i: (i, 0)),
            pl.BlockSpec((H, H), lambda i: (0, 0)),
            pl.BlockSpec((1, H), lambda i: (0, 0)),
            pl.BlockSpec((1, H), lambda i: (0, 0)),
            pl.BlockSpec((1, H), lambda i: (0, 0)),
        ],
        out_specs=pl.BlockSpec((TN, H), lambda i: (i, 0)),
        compiler_params=_cparams(),
    )(ctx, resid, wo, bo, g, b)


def _ffn_ln_kernel(x_ref, wi_ref, bi_ref, wf_ref, bf_ref, g_ref, beta_ref, o_ref, *, eps):
    x = x_ref[...]                                               # bf16 [TN, H]
    h = jnp.dot(x, wi_ref[...], preferred_element_type=jnp.float32) + bi_ref[...]
    h = jax.nn.gelu(h, approximate=True)                         # tanh GELU (cheap EUP)
    y = jnp.dot(h.astype(jnp.bfloat16), wf_ref[...],
                preferred_element_type=jnp.float32) + bf_ref[...] + x.astype(jnp.float32)
    mu = jnp.mean(y, axis=-1, keepdims=True)
    yc = y - mu
    var = jnp.mean(yc * yc, axis=-1, keepdims=True)
    o_ref[...] = (yc * lax.rsqrt(var + eps) * g_ref[...] + beta_ref[...]).astype(o_ref.dtype)


def ffn_residual_ln(x, wi, bi, wf, bfc, g, b, eps=1e-12):
    N, H = x.shape
    I = wi.shape[1]
    TN = _row_tile(N, 256)      # keep the [TN, I] intermediate modest for v7x VMEM
    kern = functools.partial(_ffn_ln_kernel, eps=eps)
    return pl.pallas_call(
        kern,
        out_shape=jax.ShapeDtypeStruct((N, H), jnp.bfloat16),
        grid=(N // TN,),
        in_specs=[
            pl.BlockSpec((TN, H), lambda i: (i, 0)),
            pl.BlockSpec((H, I), lambda i: (0, 0)),
            pl.BlockSpec((1, I), lambda i: (0, 0)),
            pl.BlockSpec((I, H), lambda i: (0, 0)),
            pl.BlockSpec((1, H), lambda i: (0, 0)),
            pl.BlockSpec((1, H), lambda i: (0, 0)),
            pl.BlockSpec((1, H), lambda i: (0, 0)),
        ],
        out_specs=pl.BlockSpec((TN, H), lambda i: (i, 0)),
        compiler_params=_cparams(),
    )(x, wi, bi, wf, bfc, g, b)


def _head_kernel(x_ref, pw_ref, pb_ref, cw_ref, cb_ref, o_ref):
    pooled = jnp.tanh(
        jnp.dot(x_ref[...], pw_ref[...], preferred_element_type=jnp.float32) + pb_ref[...])
    o_ref[...] = jnp.dot(pooled.astype(jnp.bfloat16), cw_ref[...],
                         preferred_element_type=jnp.float32) + cb_ref[...]


def pooler_classifier(cls_tok, pool_w, pool_b, cls_w_pad, cls_b_pad):
    B, H = cls_tok.shape
    Lp = cls_w_pad.shape[1]
    return pl.pallas_call(
        _head_kernel,
        out_shape=jax.ShapeDtypeStruct((B, Lp), jnp.float32),
        in_specs=[
            pl.BlockSpec((B, H), lambda: (0, 0)),
            pl.BlockSpec((H, H), lambda: (0, 0)),
            pl.BlockSpec((1, H), lambda: (0, 0)),
            pl.BlockSpec((H, Lp), lambda: (0, 0)),
            pl.BlockSpec((1, Lp), lambda: (0, 0)),
        ],
        out_specs=pl.BlockSpec((B, Lp), lambda: (0, 0)),
    )(cls_tok, pool_w, pool_b, cls_w_pad, cls_b_pad)


# --------------------------- model config / params --------------------------

CFG = dict(
    vocab_size=128,
    max_pos=16,
    hidden=128,        # lane-dense hidden dim (real FinBERT: 768)
    num_heads=2,       # dh = 64, same head dim as real BERT
    num_layers=2,
    intermediate=512,
    num_labels=3,      # FinBERT: positive / negative / neutral
    lora_r=8,
    lora_alpha=32,
)


def init_params(key, cfg):
    H, I, V, P, L = (cfg["hidden"], cfg["intermediate"], cfg["vocab_size"],
                     cfg["max_pos"], cfg["num_labels"])
    r = cfg["lora_r"]

    def nrm(k, shape, std=0.02):
        return (std * jax.random.normal(k, shape)).astype(jnp.float32)

    keys = iter(jax.random.split(key, 256))
    params = {
        "word_emb": nrm(next(keys), (V, H)),
        "pos_emb": nrm(next(keys), (P, H)),
        "tok_emb": nrm(next(keys), (2, H)),
        "emb_ln_g": jnp.ones((H,), jnp.float32),
        "emb_ln_b": jnp.zeros((H,), jnp.float32),
        "layers": [],
        "pool_w": nrm(next(keys), (H, H)),
        "pool_b": jnp.zeros((H,), jnp.float32),
        "cls_w": nrm(next(keys), (H, L)),
        "cls_b": jnp.zeros((L,), jnp.float32),
    }
    for _ in range(cfg["num_layers"]):
        layer = {
            "wq": nrm(next(keys), (H, H)), "bq": jnp.zeros((H,), jnp.float32),
            "wk": nrm(next(keys), (H, H)), "bk": jnp.zeros((H,), jnp.float32),
            "wv": nrm(next(keys), (H, H)), "bv": jnp.zeros((H,), jnp.float32),
            "wo": nrm(next(keys), (H, H)), "bo": jnp.zeros((H,), jnp.float32),
            # LoRA adapters on query / value (target_modules = ["query", "value"]).
            # PEFT initializes B = 0 (adapter is a no-op at init); A is random.
            "Aq": nrm(next(keys), (H, r)), "Bq": jnp.zeros((r, H), jnp.float32),
            "Av": nrm(next(keys), (H, r)), "Bv": jnp.zeros((r, H), jnp.float32),
            "ln1_g": jnp.ones((H,), jnp.float32), "ln1_b": jnp.zeros((H,), jnp.float32),
            "wi": nrm(next(keys), (H, I)), "bi": jnp.zeros((I,), jnp.float32),
            "wf": nrm(next(keys), (I, H)), "bf": jnp.zeros((H,), jnp.float32),
            "ln2_g": jnp.ones((H,), jnp.float32), "ln2_b": jnp.zeros((H,), jnp.float32),
        }
        params["layers"].append(layer)
    return params


def pack_params(p, cfg):
    """Kernel-ready buffers: bf16 weights, concatenated QKV with LoRA merged in
    (W' = W + (alpha/r) * A @ B — exact at inference, dropout is identity)."""
    H = cfg["hidden"]
    L = cfg["num_labels"]
    scaling = cfg["lora_alpha"] / cfg["lora_r"]

    packed = {
        "word_emb": p["word_emb"],
        "pos_emb": p["pos_emb"],
        "tok0": p["tok_emb"][0].reshape(1, H),
        "emb_ln_g": p["emb_ln_g"].reshape(1, H),
        "emb_ln_b": p["emb_ln_b"].reshape(1, H),
        "pool_w": p["pool_w"].astype(jnp.bfloat16),
        "pool_b": p["pool_b"].reshape(1, H),
        "cls_w_pad": jnp.pad(p["cls_w"], ((0, 0), (0, LABEL_PAD - L))).astype(jnp.bfloat16),
        "cls_b_pad": jnp.pad(p["cls_b"], (0, LABEL_PAD - L)).reshape(1, LABEL_PAD),
        "layers": [],
    }
    for Ld in p["layers"]:
        wq_m = Ld["wq"] + scaling * (Ld["Aq"] @ Ld["Bq"])        # LoRA merged (f32)
        wv_m = Ld["wv"] + scaling * (Ld["Av"] @ Ld["Bv"])
        w_cat = jnp.concatenate([wq_m, Ld["wk"], wv_m], axis=1).astype(jnp.bfloat16)
        b_qkv = jnp.concatenate([Ld["bq"], Ld["bk"], Ld["bv"]]).reshape(1, 3 * H)
        packed["layers"].append(dict(
            w_cat=w_cat,                      # [H, 3H] bf16
            b_qkv=b_qkv,                      # [1, 3H] f32
            wo=Ld["wo"].astype(jnp.bfloat16),
            bo=Ld["bo"].reshape(1, H),
            ln1_g=Ld["ln1_g"].reshape(1, H), ln1_b=Ld["ln1_b"].reshape(1, H),
            wi=Ld["wi"].astype(jnp.bfloat16), bi=Ld["bi"].reshape(1, -1),
            wf=Ld["wf"].astype(jnp.bfloat16), bf=Ld["bf"].reshape(1, H),
            ln2_g=Ld["ln2_g"].reshape(1, H), ln2_b=Ld["ln2_b"].reshape(1, H),
        ))
    return packed


# ------------------------------ forward pass --------------------------------


def finbert_qlora_forward(packed, input_ids, attention_mask, cfg):
    B, S = input_ids.shape
    H = cfg["hidden"]
    nh = cfg["num_heads"]
    dh = H // nh
    scale = 1.0 / math.sqrt(dh)
    N = B * S

    # ---- embeddings: XLA gather, then fused (sum + LayerNorm) Pallas kernel ----
    word_rows = packed["word_emb"][input_ids].reshape(N, H)       # f32 [N, H]
    x = embed_layernorm(word_rows, packed["pos_emb"][:S], packed["tok0"],
                        packed["emb_ln_g"], packed["emb_ln_b"], B, S)   # bf16 [N, H]

    # HF-style additive key mask: 0 where attended, -1e9 where masked (kept f32)
    mask_bias = ((1.0 - attention_mask.astype(jnp.float32)) * -1e9).reshape(B, 1, S)

    for Lp in packed["layers"]:
        qkv = qkv_proj(x, Lp["w_cat"], Lp["b_qkv"]).reshape(B, S, 3 * H)   # free reshape
        ctx = attention(qkv, mask_bias, H, nh, dh, scale).reshape(N, H)    # free reshape
        x = attn_out_residual_ln(ctx, x, Lp["wo"], Lp["bo"], Lp["ln1_g"], Lp["ln1_b"])
        x = ffn_residual_ln(x, Lp["wi"], Lp["bi"], Lp["wf"], Lp["bf"],
                            Lp["ln2_g"], Lp["ln2_b"])

    # ---- BertForSequenceClassification head: pooler(tanh) + classifier ----
    cls_tok = x.reshape(B, S, H)[:, 0, :]                          # bf16 [B, H]
    logits_pad = pooler_classifier(cls_tok, packed["pool_w"], packed["pool_b"],
                                   packed["cls_w_pad"], packed["cls_b_pad"])
    return logits_pad[:, :cfg["num_labels"]]


# ----------------------------------- main ------------------------------------

if __name__ == "__main__":
    key = jax.random.PRNGKey(0)
    k_param, k_ids = jax.random.split(key)

    params = init_params(k_param, CFG)
    packed = pack_params(params, CFG)

    B, S = 2, 8
    input_ids = jax.random.randint(k_ids, (B, S), 0, CFG["vocab_size"], dtype=jnp.int32)
    attention_mask = jnp.array(
        [[1, 1, 1, 1, 1, 1, 1, 1],
         [1, 1, 1, 1, 1, 0, 0, 0]], dtype=jnp.int32)

    logits = finbert_qlora_forward(packed, input_ids, attention_mask, CFG)
    logits = jax.block_until_ready(logits)

    assert logits.shape == (B, CFG["num_labels"])
    assert logits.dtype == jnp.float32
    assert bool(jnp.all(jnp.isfinite(logits)))
    print("KERNEL_OK")
</pallas_src>

<mosaic_0001>
module attributes {stable_mosaic.version = 11 : i64} {
  func.func @_embed_ln_kernel(%arg0: i32, %arg1: memref<8x128xf32, #tpu.memory_space<vmem>>, %arg2: memref<8x128xf32, #tpu.memory_space<vmem>>, %arg3: memref<1x128xf32, #tpu.memory_space<vmem>>, %arg4: memref<1x128xf32, #tpu.memory_space<vmem>>, %arg5: memref<1x128xf32, #tpu.memory_space<vmem>>, %arg6: memref<8x128xbf16, #tpu.memory_space<vmem>>) attributes {dimension_semantics = [#tpu.dimension_semantics<parallel>], iteration_bounds = array<i64: 2>, scalar_prefetch = 0 : i64, scratch_operands = 0 : i64, tpu.core_type = #tpu.core_type<tc>, window_params = [{transform_indices = @transform_0, window_bounds = array<i64: 8, 128>}, {pipeline_mode = #tpu.pipeline_mode<synchronous>, transform_indices = @transform_1, window_bounds = array<i64: 8, 128>}, {pipeline_mode = #tpu.pipeline_mode<synchronous>, transform_indices = @transform_2, window_bounds = array<i64: 1, 128>}, {pipeline_mode = #tpu.pipeline_mode<synchronous>, transform_indices = @transform_3, window_bounds = array<i64: 1, 128>}, {pipeline_mode = #tpu.pipeline_mode<synchronous>, transform_indices = @transform_4, window_bounds = array<i64: 1, 128>}, {transform_indices = @transform_5, window_bounds = array<i64: 8, 128>}]} {
    %c0 = arith.constant 0 : index
    %c0_0 = arith.constant 0 : index
    %0 = vector.load %arg1[%c0, %c0_0] : memref<8x128xf32, #tpu.memory_space<vmem>>, vector<8x128xf32>
    %c0_1 = arith.constant 0 : index
    %c0_2 = arith.constant 0 : index
    %1 = vector.load %arg2[%c0_1, %c0_2] : memref<8x128xf32, #tpu.memory_space<vmem>>, vector<8x128xf32>
    %2 = arith.addf %0, %1 : vector<8x128xf32>
    %c0_3 = arith.constant 0 : index
    %c0_4 = arith.constant 0 : index
    %3 = vector.load %arg3[%c0_3, %c0_4] : memref<1x128xf32, #tpu.memory_space<vmem>>, vector<1x128xf32>
    %4 = vector.broadcast %3 : vector<1x128xf32> to vector<8x128xf32>
    %5 = arith.addf %2, %4 : vector<8x128xf32>
    %cst = arith.constant dense<0.000000e+00> : vector<8xf32>
    %6 = vector.multi_reduction <add>, %5, %cst [1] : vector<8x128xf32> to vector<8xf32>
    %7 = vector.shape_cast %6 : vector<8xf32> to vector<8x1xf32>
    %cst_5 = arith.constant 1.280000e+02 : f32
    %8 = vector.broadcast %cst_5 : f32 to vector<8x1xf32>
    %9 = arith.divf %7, %8 : vector<8x1xf32>
    %10 = vector.broadcast %9 : vector<8x1xf32> to vector<8x128xf32>
    %11 = arith.subf %5, %10 : vector<8x128xf32>
    %12 = arith.mulf %11, %11 : vector<8x128xf32>
    %cst_6 = arith.constant dense<0.000000e+00> : vector<8xf32>
    %13 = vector.multi_reduction <add>, %12, %cst_6 [1] : vector<8x128xf32> to vector<8xf32>
    %14 = vector.shape_cast %13 : vector<8xf32> to vector<8x1xf32>
    %cst_7 = arith.constant 1.280000e+02 : f32
    %15 = vector.broadcast %cst_7 : f32 to vector<8x1xf32>
    %16 = arith.divf %14, %15 : vector<8x1xf32>
    %cst_8 = arith.constant 9.99999996E-13 : f32
    %17 = vector.broadcast %cst_8 : f32 to vector<8x1xf32>
    %18 = arith.addf %16, %17 : vector<8x1xf32>
    %19 = math.rsqrt %18 : vector<8x1xf32>
    %20 = vector.broadcast %19 : vector<8x1xf32> to vector<8x128xf32>
    %21 = arith.mulf %11, %20 : vector<8x128xf32>
    %c0_9 = arith.constant 0 : index
    %c0_10 = arith.constant 0 : index
    %22 = vector.load %arg4[%c0_9, %c0_10] : memref<1x128xf32, #tpu.memory_space<vmem>>, vector<1x128xf32>
    %23 = vector.broadcast %22 : vector<1x128xf32> to vector<8x128xf32>
    %24 = arith.mulf %21, %23 : vector<8x128xf32>
    %c0_11 = arith.constant 0 : index
    %c0_12 = arith.constant 0 : index
    %25 = vector.load %arg5[%c0_11, %c0_12] : memref<1x128xf32, #tpu.memory_space<vmem>>, vector<1x128xf32>
    %26 = vector.broadcast %25 : vector<1x128xf32> to vector<8x128xf32>
    %27 = arith.addf %24, %26 : vector<8x128xf32>
    %28 = arith.truncf %27 : vector<8x128xf32> to vector<8x128xbf16>
    %c0_13 = arith.constant 0 : index
    %c0_14 = arith.constant 0 : index
    %29 = vector.load %arg6[%c0_13, %c0_14] : memref<8x128xbf16, #tpu.memory_space<vmem>>, vector<8x128xbf16>
    tpu.vector_store %arg6[%c0_13, %c0_14], %28 {strides = array<i32>} : memref<8x128xbf16, #tpu.memory_space<vmem>>, vector<8x128xbf16>,
    return
  }
  func.func @transform_0(%arg0: i32) -> (i32, i32) {
    %c0_i32 = arith.constant 0 : i32
    %c0_i32_0 = arith.constant 0 : i32
    return %arg0, %c0_i32 : i32, i32
  }
  func.func @transform_1(%arg0: i32) -> (i32, i32) {
    %c0_i32 = arith.constant 0 : i32
    %c0_i32_0 = arith.constant 0 : i32
    %c0_i32_1 = arith.constant 0 : i32
    return %c0_i32, %c0_i32_0 : i32, i32
  }
  func.func @transform_2(%arg0: i32) -> (i32, i32) {
    %c0_i32 = arith.constant 0 : i32
    %c0_i32_0 = arith.constant 0 : i32
    %c0_i32_1 = arith.constant 0 : i32
    return %c0_i32, %c0_i32_0 : i32, i32
  }
  func.func @transform_3(%arg0: i32) -> (i32, i32) {
    %c0_i32 = arith.constant 0 : i32
    %c0_i32_0 = arith.constant 0 : i32
    %c0_i32_1 = arith.constant 0 : i32
    return %c0_i32, %c0_i32_0 : i32, i32
  }
  func.func @transform_4(%arg0: i32) -> (i32, i32) {
    %c0_i32 = arith.constant 0 : i32
    %c0_i32_0 = arith.constant 0 : i32
    %c0_i32_1 = arith.constant 0 : i32
    return %c0_i32, %c0_i32_0 : i32, i32
  }
  func.func @transform_5(%arg0: i32) -> (i32, i32) {
    %c0_i32 = arith.constant 0 : i32
    %c0_i32_0 = arith.constant 0 : i32
    return %arg0, %c0_i32 : i32, i32
  }
}

</mosaic_0001>

<llo_original>
// kernel: tpu_custom_call.1
$region0: #{tpu_custom_call.1}
  #allocation0 [shape = 'u32[]', space=smem, size = 0x4, offset = 0x4, fixed_abs, tag = 'smem constant byte address 0x4 - core index']
  #allocation1 [shape = 'u32[144,128]{1,0:T(1,128)}', space=vmem, size = 0x12000, scoped, tag = 'internal scratch']
  %s0 = inlined_call_operand.hbm [shape: f32[16,128], index: 0, kind: input, shape index: {}]
  %s1 = inlined_call_operand.hbm [shape: f32[8,128], index: 1, kind: input, shape index: {}]
  %s2 = inlined_call_operand.vmem [shape: f32[1,128], index: 2, kind: input, shape index: {}]
  %s3 = inlined_call_operand.vmem [shape: f32[1,128], index: 3, kind: input, shape index: {}]
  %s4 = inlined_call_operand.vmem [shape: f32[1,128], index: 4, kind: input, shape index: {}]
  %s5 = inlined_call_operand.hbm [shape: bf16[16,128], index: 5, kind: output, shape index: {}]
  %s6 = sld [smem:[#allocation0]]
  $region61: #{tpu_custom_call.1} parent=0
    _
  %s8 = ssub.s32 1, %s6
  %s9 = scalar_select 0, %s8, %s6
  $region1: #{tpu_custom_call.1} parent=0
    #allocation2 [shape = 'u8[8192]{0}', space=vmem, size = 0x2000, scoped, tag = 'input window, operand 0']
    #allocation3 [shape = 's32[2]{0}', space=sflag, size = 0x8, scoped, tag = 'scoped memory for tpu_custom_call.1']
    #allocation4 [shape = 's32[2]{0}', space=sflag, size = 0x8, scoped, tag = 'scoped memory for tpu_custom_call.1']
    #allocation5 [shape = 'u8[4096]{0}', space=vmem, size = 0x1000, scoped, tag = 'input window, operand 1, single buffered']
    #allocation6 [shape = 's32[1]{0}', space=sflag, size = 0x4, scoped, tag = 'scoped memory for tpu_custom_call.1']
    #allocation7 [shape = 'u8[4096]{0}', space=vmem, size = 0x1000, scoped, tag = 'output window, operand 0']
    %10 = vsyncpa [#allocation3], 0
    %s11 = scalar_lea.sflag [#allocation3], 1
    %12 = vsyncpa %s11, 0
    %13 = vsyncpa [#allocation6], 0
    %14 = vsyncpa [#allocation4], 0
    %s15 = scalar_lea.sflag [#allocation4], 1
    %16 = vsyncpa %s15, 0
    loop: start=0, step=1, limit=4
    $region2: #{tpu_custom_call.1} parent=1 // loop_pre_header
      _
    $region3: #{tpu_custom_call.1} parent=1 // loop_header
      %s18 = sphi 0, %s22
      %p19 = scmp.ge.s32.totalorder %s18, 4
      %s28 = sphi 0, %s30
      %s31 = sphi 0, %s28
      %s32 = sphi 0, %s31
      %s48 = sphi 0, %s32
      %s52 = sphi 0, %s52
      %s54 = sphi 0, %s52
      %s55 = sphi 0, %s54
      %s69 = sphi 0, %s55
      %s73 = sphi 0, %s73
      %s75 = sphi 0, %s73
      %s76 = sphi 0, %s75
      %s90 = sphi 0, %s76
      %s94 = sphi 0, %s94
      %s96 = sphi 0, %s94
      %s97 = sphi 0, %s96
      %s111 = sphi 0, %s97
      %s115 = sphi 0, %s115
      %s117 = sphi 0, %s115
      %s118 = sphi 0, %s117
      %s132 = sphi 0, %s118
      %s138 = sphi 0, %s140
      %s141 = sphi 0, %s138
      %s142 = sphi 0, %s141
      %s158 = sphi 0, %s142
    $region4: #{tpu_custom_call.1} parent=1 // loop_header_branch
      %21 = sbr.rel (%p19) target = $region8
    $region5: #{tpu_custom_call.1} parent=1 // loop_body
      %s23 = ssub.s32 %s18, 1
      %s24 = ssub.s32 %s18, 2
      %s25 = sadd.s32 %s18, 1
      %s26 = ssub.s32 %s18, %s25
      %p27 = scmp.eq.s32.totalorder %s26, 0
      %s29 = sadd.s32 %s28, 1
      %s30 = scalar_select %p27, %s28, %s29
      %p33 = pneg %p27
      %p34 = scmp.eq.s32.totalorder %s18, 1
      %p35 = por %p33, %p34
      %p36 = scmp.ne.s32.totalorder %s28, %s31
      %p37 = scmp.eq.s32.totalorder %s18, 0
      %p38 = por %p36, %p37
      %p39 = scmp.ne.s32.totalorder %s28, %s31
      %p40 = scmp.eq.s32.totalorder %s23, 1
      %p41 = por %p39, %p40
      %p42 = scmp.ne.s32.totalorder %s31, %s32
      %p43 = scmp.eq.s32.totalorder %s23, 0
      %p44 = por %p42, %p43
      %p45 = scmp.ne.s32.totalorder %s31, %s32
      %p46 = scmp.eq.s32.totalorder %s24, 1
      %p47 = por %p45, %p46
      %p49 = scmp.ne.s32.totalorder %s32, %s48
      %p50 = scmp.eq.s32.totalorder %s24, 0
      %p51 = por %p49, %p50
      %s53 = sadd.s32 %s52, 1
      %p56 = scmp.eq.s32.totalorder %s18, 1
      %p57 = scmp.ne.s32.totalorder %s52, %s54
      %p58 = scmp.eq.s32.totalorder %s18, 0
      %p59 = por %p57, %p58
      %p60 = scmp.ne.s32.totalorder %s52, %s54
      %p61 = scmp.eq.s32.totalorder %s23, 1
      %p62 = por %p60, %p61
      %p63 = scmp.ne.s32.totalorder %s54, %s55
      %p64 = scmp.eq.s32.totalorder %s23, 0
      %p65 = por %p63, %p64
      %p66 = scmp.ne.s32.totalorder %s54, %s55
      %p67 = scmp.eq.s32.totalorder %s24, 1
      %p68 = por %p66, %p67
      %p70 = scmp.ne.s32.totalorder %s55, %s69
      %p71 = scmp.eq.s32.totalorder %s24, 0
      %p72 = por %p70, %p71
      %s74 = sadd.s32 %s73, 1
      %p77 = scmp.eq.s32.totalorder %s18, 1
      %p78 = scmp.ne.s32.totalorder %s73, %s75
      %p79 = scmp.eq.s32.totalorder %s18, 0
      %p80 = por %p78, %p79
      %p81 = scmp.ne.s32.totalorder %s73, %s75
      %p82 = scmp.eq.s32.totalorder %s23, 1
      %p83 = por %p81, %p82
      %p84 = scmp.ne.s32.totalorder %s75, %s76
      %p85 = scmp.eq.s32.totalorder %s23, 0
      %p86 = por %p84, %p85
      %p87 = scmp.ne.s32.totalorder %s75, %s76
      %p88 = scmp.eq.s32.totalorder %s24, 1
      %p89 = por %p87, %p88
      %p91 = scmp.ne.s32.totalorder %s76, %s90
      %p92 = scmp.eq.s32.totalorder %s24, 0
      %p93 = por %p91, %p92
      %s95 = sadd.s32 %s94, 1
      %p98 = scmp.eq.s32.totalorder %s18, 1
      %p99 = scmp.ne.s32.totalorder %s94, %s96
      %p100 = scmp.eq.s32.totalorder %s18, 0
      %p101 = por %p99, %p100
      %p102 = scmp.ne.s32.totalorder %s94, %s96
      %p103 = scmp.eq.s32.totalorder %s23, 1
      %p104 = por %p102, %p103
      %p105 = scmp.ne.s32.totalorder %s96, %s97
      %p106 = scmp.eq.s32.totalorder %s23, 0
      %p107 = por %p105, %p106
      %p108 = scmp.ne.s32.totalorder %s96, %s97
      %p109 = scmp.eq.s32.totalorder %s24, 1
      %p110 = por %p108, %p109
      %p112 = scmp.ne.s32.totalorder %s97, %s111
      %p113 = scmp.eq.s32.totalorder %s24, 0
      %p114 = por %p112, %p113
      %s116 = sadd.s32 %s115, 1
      %p119 = scmp.eq.s32.totalorder %s18, 1
      %p120 = scmp.ne.s32.totalorder %s115, %s117
      %p121 = scmp.eq.s32.totalorder %s18, 0
      %p122 = por %p120, %p121
      %p123 = scmp.ne.s32.totalorder %s115, %s117
      %p124 = scmp.eq.s32.totalorder %s23, 1
      %p125 = por %p123, %p124
      %p126 = scmp.ne.s32.totalorder %s117, %s118
      %p127 = scmp.eq.s32.totalorder %s23, 0
      %p128 = por %p126, %p127
      %p129 = scmp.ne.s32.totalorder %s117, %s118
      %p130 = scmp.eq.s32.totalorder %s24, 1
      %p131 = por %p129, %p130
      %p133 = scmp.ne.s32.totalorder %s118, %s132
      %p134 = scmp.eq.s32.totalorder %s24, 0
      %p135 = por %p133, %p134
      %s136 = ssub.s32 %s18, %s25
      %p137 = scmp.eq.s32.totalorder %s136, 0
      %s139 = sadd.s32 %s138, 1
      %s140 = scalar_select %p137, %s138, %s139
      %p143 = pneg %p137
      %p144 = scmp.eq.s32.totalorder %s18, 1
      %p145 = por %p143, %p144
      %p146 = scmp.ne.s32.totalorder %s138, %s141
      %p147 = scmp.eq.s32.totalorder %s18, 0
      %p148 = por %p146, %p147
      %p149 = scmp.ne.s32.totalorder %s138, %s141
      %p150 = scmp.eq.s32.totalorder %s23, 1
      %p151 = por %p149, %p150
      %p152 = scmp.ne.s32.totalorder %s141, %s142
      %p153 = scmp.eq.s32.totalorder %s23, 0
      %p154 = por %p152, %p153
      %p155 = scmp.ne.s32.totalorder %s141, %s142
      %p156 = scmp.eq.s32.totalorder %s24, 1
      %p157 = por %p155, %p156
      %p159 = scmp.ne.s32.totalorder %s142, %s158
      %p160 = scmp.eq.s32.totalorder %s24, 0
      %p161 = por %p159, %p160
      %p162 = scmp.le.s32.totalorder 1, %s18
      %p163 = scmp.lt.s32.totalorder %s18, 3
      %p164 = pnand %p162, %p163
      %p165 = pneg %p164
      // Predicated region
      $region9: #{tpu_custom_call.1} parent=5 // pred_check
        _
      $region10: #{tpu_custom_call.1} parent=5 // pred_check_branch
        %167 = sbr.rel (%p164) target = $region12
      $region11: #{tpu_custom_call.1} parent=5 // pred_region
        %s168 = ssub.s32 %s18, 1
        // Predicated region
        $region13: #{tpu_custom_call.1} parent=11 // pred_check
          %p169 = pneg %p65
        $region14: #{tpu_custom_call.1} parent=11 // pred_check_branch
          %171 = sbr.rel (%p169) target = $region16
        $region15: #{tpu_custom_call.1} parent=11 // pred_region
          %s173 = ssub.s32 128, 128
          %174 = vsyncadd [#allocation6], %s173
          %s176 = sshll.u32 [#allocation5], 4
          %s177 = int_to_ptr.vmem [resolvable:$true] %s176
          %179 = dma.hbm_to_vmem [thread:$0]  %s1, 128, %s177, [#allocation6]
        $region16: #{tpu_custom_call.1} parent=11 // pred_fallthru
          _
        // Predicated region
        $region17: #{tpu_custom_call.1} parent=11 // pred_check
          %p180 = pneg %p86
        $region18: #{tpu_custom_call.1} parent=11 // pred_check_branch
          %182 = sbr.rel (%p180) target = $region20
        $region19: #{tpu_custom_call.1} parent=11 // pred_region
          _
        $region20: #{tpu_custom_call.1} parent=11 // pred_fallthru
          _
        // Predicated region
        $region21: #{tpu_custom_call.1} parent=11 // pred_check
          %p183 = pneg %p107
        $region22: #{tpu_custom_call.1} parent=11 // pred_check_branch
          %185 = sbr.rel (%p183) target = $region24
        $region23: #{tpu_custom_call.1} parent=11 // pred_region
          _
        $region24: #{tpu_custom_call.1} parent=11 // pred_fallthru
          _
        // Predicated region
        $region25: #{tpu_custom_call.1} parent=11 // pred_check
          %p186 = pneg %p128
        $region26: #{tpu_custom_call.1} parent=11 // pred_check_branch
          %188 = sbr.rel (%p186) target = $region28
        $region27: #{tpu_custom_call.1} parent=11 // pred_region
          _
        $region28: #{tpu_custom_call.1} parent=11 // pred_fallthru
          _
      $region12: #{tpu_custom_call.1} parent=5 // pred_fallthru
        _
      %p189 = scmp.lt.s32.totalorder %s18, 2
      // Predicated region
      $region29: #{tpu_custom_call.1} parent=5 // pred_check
        %p190 = pneg %p189
      $region30: #{tpu_custom_call.1} parent=5 // pred_check_branch
        %192 = sbr.rel (%p190) target = $region32
      $region31: #{tpu_custom_call.1} parent=5 // pred_region
        // Predicated region
        $region33: #{tpu_custom_call.1} parent=31 // pred_check
          %p193 = pneg %p38
        $region34: #{tpu_custom_call.1} parent=31 // pred_check_branch
          %195 = sbr.rel (%p193) target = $region36
        $region35: #{tpu_custom_call.1} parent=31 // pred_region
          %s196 = sand.u32 %s28, 1
          %s197 = scalar_lea.sflag [#allocation3], %s196
          %s198 = sand.u32 %s28, 1
          %s199 = smul.addr %s198, 8
          %s200 = scalar_lea.vmem [#allocation2], %s199
          %s202 = ssub.s32 128, 128
          %203 = vsyncadd %s197, %s202
          %s204 = smul.addr %s18, 128
          %s205 = scalar_lea.hbm %s0, %s204
          %s207 = sshll.u32 %s200, 4
          %s208 = int_to_ptr.vmem [resolvable:$true] %s207
          %210 = dma.hbm_to_vmem [thread:$0]  %s205, 128, %s208, %s197
        $region36: #{tpu_custom_call.1} parent=31 // pred_fallthru
          _
      $region32: #{tpu_custom_call.1} parent=5 // pred_fallthru
        _
      %p211 = scmp.le.s32.totalorder 1, %s18
      %p212 = scmp.lt.s32.totalorder %s18, 3
      %p213 = pnand %p211, %p212
      %p214 = pneg %p213
      // Predicated region
      $region37: #{tpu_custom_call.1} parent=5 // pred_check
        _
      $region38: #{tpu_custom_call.1} parent=5 // pred_check_branch
        %216 = sbr.rel (%p213) target = $region40
      $region39: #{tpu_custom_call.1} parent=5 // pred_region
        %s217 = ssub.s32 %s18, 1
        %s218 = sand.u32 %s31, 1
        %s219 = scalar_lea.sflag [#allocation3], %s218
        %s220 = sand.u32 %s31, 1
        %s221 = smul.addr %s220, 8
        %s222 = scalar_lea.vmem [#allocation2], %s221
        // Predicated region
        $region41: #{tpu_custom_call.1} parent=39 // pred_check
          %p223 = pneg %p44
        $region42: #{tpu_custom_call.1} parent=39 // pred_check_branch
          %225 = sbr.rel (%p223) target = $region44
        $region43: #{tpu_custom_call.1} parent=39 // pred_region
          %226 = dma.done %s219, 128
        $region44: #{tpu_custom_call.1} parent=39 // pred_fallthru
          _
        // Predicated region
        $region45: #{tpu_custom_call.1} parent=39 // pred_check
          %p227 = pneg %p65
        $region46: #{tpu_custom_call.1} parent=39 // pred_check_branch
          %229 = sbr.rel (%p227) target = $region48
        $region47: #{tpu_custom_call.1} parent=39 // pred_region
          %230 = dma.done [#allocation6], 128
        $region48: #{tpu_custom_call.1} parent=39 // pred_fallthru
          _
        %s231 = sand.u32 %s31, 1
        %s232 = scalar_lea.sflag [#allocation3], %s231
        %s233 = sand.u32 %s31, 1
        %s234 = smul.addr %s233, 8
        %s235 = scalar_lea.vmem [#allocation2], %s234
        %p236 = pneg %p44
        %p237 = pneg %p41
        %p238 = pneg %p65
        %p239 = pneg %p62
        %p240 = pneg %p86
        %p241 = pneg %p83
        %p242 = pneg %p107
        %p243 = pneg %p104
        %p244 = pneg %p128
        %p245 = pneg %p125
        %p246 = pneg %p154
        %p247 = pneg %p151
        %s248 = sand.u32 %s141, 1
        %s249 = scalar_lea.sflag [#allocation4], %s248
        %s250 = sand.u32 %s141, 1
        %s251 = smul.addr %s250, 4
        %s252 = scalar_lea.vmem [#allocation7], %s251
        %v253 = vld [vmem:[%s222] sm:$0xff]
        %v254 = vld [vmem:[#allocation5] sm:$0xff]
        %v255 = vadd.f32 %v253, %v254
        %v256 = vld [vmem:[%s2] sm:$0x1]
        %v258 = vlaneseq
        %v259 = vshrl.u32 %v258, 7
        %v260 = vsub.s32 0, %v259
        %v261 = vrot.slane %v256, %v260
        %v263 = vadd.f32 %v255, %v261
        %264 = vadd.xlane.f32.xlu0 %v263
        %v265 = vpop.xlane.xlu0 %264
        %v266 = vrcp.pop 128.0
        %v267 = vmul.f32 %v265, %v266
        %v268 = vsub.f32 %v263, %v267
        %v269 = vmul.f32 %v268, %v268
        %270 = vadd.xlane.f32.xlu0 %v269
        %v271 = vpop.xlane.xlu0 %270
        %v272 = vmul.f32 %v271, %v266
        %v273 = vadd.f32 %v272, 1e-12
        %v274 = vrsqrt.pop %v273
        %v275 = vmul.f32 %v268, %v274
        %v276 = vld [vmem:[%s3] sm:$0x1]
        %v278 = vlaneseq
        %v279 = vshrl.u32 %v278, 7
        %v280 = vsub.s32 0, %v279
        %v281 = vrot.slane %v276, %v280
        %v283 = vmul.f32 %v275, %v281
        %v284 = vld [vmem:[%s4] sm:$0x1]
        %v286 = vlaneseq
        %v287 = vshrl.u32 %v286, 7
        %v288 = vsub.s32 0, %v287
        %v289 = vrot.slane %v284, %v288
        %v291 = vadd.f32 %v283, %v289
        %v292 = vpack.c.bf16 %v291, %v291
        %293 = vst [vmem:[%s252] sm:$0xf] %v292
        %s294 = sand.u32 %s141, 1
        %s295 = scalar_lea.sflag [#allocation4], %s294
        %s296 = sand.u32 %s141, 1
        %s297 = smul.addr %s296, 4
        %s298 = scalar_lea.vmem [#allocation7], %s297
        // Predicated region
        $region49: #{tpu_custom_call.1} parent=39 // pred_check
          %p299 = pneg %p151
        $region50: #{tpu_custom_call.1} parent=39 // pred_check_branch
          %301 = sbr.rel (%p299) target = $region52
        $region51: #{tpu_custom_call.1} parent=39 // pred_region
          %s303 = ssub.s32 64, 64
          %304 = vsyncadd %s295, %s303
          %s305 = smul.addr %s23, 64
          %s306 = scalar_lea.hbm %s5, %s305
          %s308 = sshll.u32 %s298, 4
          %s309 = int_to_ptr.vmem [resolvable:$true] %s308
          %311 = dma.vmem_to_hbm [thread:$0]  %s309, 64, %s306, %s295
        $region52: #{tpu_custom_call.1} parent=39 // pred_fallthru
          _
      $region40: #{tpu_custom_call.1} parent=5 // pred_fallthru
        _
      %p312 = scmp.le.s32.totalorder 2, %s18
      // Predicated region
      $region53: #{tpu_custom_call.1} parent=5 // pred_check
        %p313 = pneg %p312
      $region54: #{tpu_custom_call.1} parent=5 // pred_check_branch
        %315 = sbr.rel (%p313) target = $region56
      $region55: #{tpu_custom_call.1} parent=5 // pred_region
        %s316 = ssub.s32 %s18, 2
        // Predicated region
        $region57: #{tpu_custom_call.1} parent=55 // pred_check
          %p317 = pneg %p157
        $region58: #{tpu_custom_call.1} parent=55 // pred_check_branch
          %319 = sbr.rel (%p317) target = $region60
        $region59: #{tpu_custom_call.1} parent=55 // pred_region
          %s320 = sand.u32 %s142, 1
          %s321 = scalar_lea.sflag [#allocation4], %s320
          %s322 = sand.u32 %s142, 1
          %s323 = smul.addr %s322, 4
          %s324 = scalar_lea.vmem [#allocation7], %s323
          %325 = dma.done %s321, 64
        $region60: #{tpu_custom_call.1} parent=55 // pred_fallthru
          _
      $region56: #{tpu_custom_call.1} parent=5 // pred_fallthru
        _
    $region6: #{tpu_custom_call.1} parent=1 // loop_footer
      %s22 = sadd.s32 1, %s18
    $region7: #{tpu_custom_call.1} parent=1 // loop_footer_branch
      %17 = sbr.rel target = $region3
    $region8: #{tpu_custom_call.1} parent=1 // loop_exit
      _
    %326 = vsyncpa [#allocation3], 1
    %s327 = scalar_lea.sflag [#allocation3], 1
    %328 = vsyncpa %s327, 1
    %329 = vsyncpa [#allocation6], 1
    %330 = vsyncpa [#allocation4], 1
    %s331 = scalar_lea.sflag [#allocation4], 1
    %332 = vsyncpa %s331, 1

</llo_original>
